<compile_context>
chip_gen: v7x
topology: tpu7x:2x2x1
jax: 0.10.0
libtpu: 0.0.40
codegen_flags: <defaults>
</compile_context>

<pallas_src>
import functools

import jax
import jax.numpy as jnp
from jax.experimental import pallas as pl
from jax.experimental.pallas import tpu as pltpu


_TRANSCENDENTAL = ("tanh", "sigmoid", "exp")


# ----------------------------- non-linearities -----------------------------
def _apply_non_linearity(name, x):
    if name == "relu":
        return jnp.maximum(x, 0.0)
    elif name == "tanh":
        return jnp.tanh(x)
    elif name == "sigmoid":
        return jax.nn.sigmoid(x)
    elif name == "exp":
        return jnp.exp(x)
    elif name == "lrelu":
        return jnp.where(x > 0, x, 0.01 * x)  # matches F.leaky_relu default slope
    elif name == "srelu":
        return jnp.clip(x, 0.0, 1.0)
    elif name == "none":
        return x
    raise ValueError(f"unknown non-linearity {name}")


# --------------------------------- kernel ----------------------------------
def _reale_kernel(r_ref, e_ref, bias_ref, sel_ref, out_ref, *, non_linearity,
                  ent_non_linearity):
    # r_ref, e_ref : (TB, A*D) bf16 -- batch on the sublane axis, features lane-dense
    # bias_ref     : (TB, nw)  f32
    # sel_ref      : (A*D, nw) f32 constant 0/1 group-selection matrix
    # out_ref      : (TB, 1)   f32 (output traffic is negligible -> masked
    #                               column stores are irrelevant here)
    r = r_ref[...].astype(jnp.float32)                       # upcast once (v5e-safe)
    e = _apply_non_linearity(ent_non_linearity,
                             e_ref[...].astype(jnp.float32))
    prod = r * e                                             # (TB, A*D) f32
    # grouped (arity, w) -> nw reduction on the MXU: keeps everything
    # lane-dense (no reshape to a tiny nw lane dim) and off the VPU slot.
    core = jnp.dot(prod, sel_ref[...],
                   preferred_element_type=jnp.float32)       # (TB, nw)
    act = _apply_non_linearity(non_linearity, core + bias_ref[...])
    # input_dropout / hidden_dropout are identity in eval mode
    out_ref[...] = jnp.sum(act, axis=1, keepdims=True)       # (TB, 1)


# ------------------------------ tile selection ------------------------------
def _pick_batch_tile(B, AD, NW, in_itemsize):
    """Pick the batch-tile (sublane) size for (tb, AD) blocks.

    The budget counts the bf16 double-buffered inputs AND the f32
    upcast/nonlinearity/product temporaries plus the resident selection
    matrix, so one pipeline step stays well inside scoped VMEM on every
    generation (v5e 16 MiB default raised explicitly, v6e 32 MiB,
    v7x 32 MiB scoped / 64 MiB physical).
    """
    per_row = 4 * AD * in_itemsize + 12 * AD + 16 * NW + 64
    sel_bytes = 2 * AD * NW * 4
    budget = (16 << 20) - min(sel_bytes, 8 << 20)
    tb = max(8, budget // per_row)
    tb = min(tb, 4096, B)
    if B >= 16:
        # keep >= 2 batch tiles so v7x megacore can shard the "parallel" axis
        tb = min(tb, (B + 1) // 2)
    if tb < B:
        tb = max(8, (tb // 8) * 8)   # sublane-aligned; last block may be partial
    else:
        tb = B                       # single full-extent block (no divisibility req)
    return int(tb), per_row, sel_bytes


# ------------------------------ kernel wrapper ------------------------------
def reale_score(r, ents, bias, sel, *, non_linearity, ent_non_linearity):
    """r/ents: (B, A*D), bias: (B, nw) f32, sel: (A*D, nw) f32 -> (B,) f32."""
    B, AD = r.shape
    NW = bias.shape[-1]
    assert ents.shape == (B, AD) and sel.shape == (AD, NW)
    itemsize = jnp.dtype(r.dtype).itemsize

    tb, per_row, sel_bytes = _pick_batch_tile(B, AD, NW, itemsize)
    grid_b = pl.cdiv(B, tb)

    kernel = functools.partial(
        _reale_kernel,
        non_linearity=non_linearity,
        ent_non_linearity=ent_non_linearity,
    )

    # advisory cost estimate
    flops = B * AD + 2 * B * AD * NW + 3 * B * NW
    transc = ((B * AD) if ent_non_linearity in _TRANSCENDENTAL else 0) + \
             ((B * NW) if non_linearity in _TRANSCENDENTAL else 0)
    bytes_accessed = 2 * B * AD * itemsize + B * NW * 4 + AD * NW * 4 + B * 4

    # enough for double-buffered inputs + f32 temporaries + selection matrix,
    # with headroom, but safely under v7x's 64 MiB physical per-TC VMEM.
    vmem_limit = min(48 << 20,
                     max(32 << 20, int(per_row * tb + sel_bytes) + (8 << 20)))

    out = pl.pallas_call(
        kernel,
        out_shape=jax.ShapeDtypeStruct((B, 1), jnp.float32),
        grid=(grid_b,),
        in_specs=[
            pl.BlockSpec((tb, AD), lambda i: (i, 0)),   # relation rows
            pl.BlockSpec((tb, AD), lambda i: (i, 0)),   # entity rows (concat arity)
            pl.BlockSpec((tb, NW), lambda i: (i, 0)),   # relation bias
            pl.BlockSpec((AD, NW), lambda i: (0, 0)),   # selection matrix (resident)
        ],
        out_specs=pl.BlockSpec((tb, 1), lambda i: (i, 0)),
        compiler_params=pltpu.CompilerParams(
            dimension_semantics=("parallel",),          # batch tiles independent
            vmem_limit_bytes=int(vmem_limit),
        ),
        cost_estimate=pl.CostEstimate(
            flops=int(flops),
            transcendentals=int(transc),
            bytes_accessed=int(bytes_accessed),
        ),
    )(r, ents, bias, sel)
    return out[:, 0]


# ------------------------------ model wrapper -------------------------------
class RealEPallas:
    MAX_ARITY = 6

    def __init__(self, num_ent, num_rel, emb_dim, *, window_size,
                 non_linearity, ent_non_linearity, key,
                 wire_dtype=jnp.bfloat16):
        assert emb_dim % window_size == 0
        self.emb_dim = emb_dim
        self.w = window_size
        self.nw = emb_dim // window_size
        self.non_linearity = non_linearity
        self.ent_non_linearity = ent_non_linearity
        self.wire_dtype = wire_dtype

        k_e, k_r, k_b = jax.random.split(key, 3)

        # xavier_normal_-style init (gain=1): std = sqrt(2/(fin+fout))
        def xavier_normal(k, shape):
            fan_out, fan_in = shape
            std = (2.0 / (fan_in + fan_out)) ** 0.5
            return std * jax.random.normal(k, shape, dtype=jnp.float32)

        E = xavier_normal(k_e, (num_ent, emb_dim))
        E = E.at[0].set(0.0)  # padding_idx=0 / init() zeroes entity row 0
        self.E = E
        self.R = xavier_normal(k_r, (num_rel, emb_dim * self.MAX_ARITY))
        self.R_bias = xavier_normal(k_b, (num_rel, self.nw))

        # bf16 shadow tables: gathers / wire HBM traffic at half width.
        # (Set wire_dtype=jnp.float32 for exact f32 PyTorch-parity scores.)
        self.E_wire = self.E.astype(wire_dtype)
        self.R_wire = self.R.astype(wire_dtype)

        # constant 0/1 selection matrix implementing the grouped
        # (arity, w) -> nw reduction as one MXU matmul.
        self.sel = jnp.tile(jnp.eye(self.nw, dtype=jnp.float32),
                            (self.MAX_ARITY * self.w, 1))    # (6*emb_dim, nw)

    def __call__(self, r_idx, e1, e2, e3, e4, e5, e6):
        # Embedding gathers stay in XLA but move bf16 rows; the kernel consumes
        # the natural batch-major (B, 6*D) layout, so no cast / transpose / pad
        # passes over the gathered tensors.
        r = jnp.take(self.R_wire, r_idx, axis=0)                        # (B, 6*D)
        ents = jnp.concatenate(
            [jnp.take(self.E_wire, idx, axis=0)
             for idx in (e1, e2, e3, e4, e5, e6)], axis=1)              # (B, 6*D)
        bias = jnp.take(self.R_bias, r_idx, axis=0)                     # (B, nw) f32
        return reale_score(r, ents, bias, self.sel,
                           non_linearity=self.non_linearity,
                           ent_non_linearity=self.ent_non_linearity)


# ---------------------------- reference (JAX) --------------------------------
def reale_reference(model, r_idx, e1, e2, e3, e4, e5, e6):
    # Uses the same wire precision (bf16 embeddings) as the kernel, f32 math.
    B = r_idx.shape[0]
    A, w, nw = model.MAX_ARITY, model.w, model.nw
    wd = model.wire_dtype
    r = model.R[r_idx].astype(wd).astype(jnp.float32).reshape(B, A, w, nw)
    ents = jnp.stack([model.E[e] for e in (e1, e2, e3, e4, e5, e6)], axis=1)
    ents = ents.astype(wd).astype(jnp.float32)
    ents = _apply_non_linearity(model.ent_non_linearity, ents).reshape(B, A, w, nw)
    core = jnp.sum(r * ents, axis=(1, 2)) + model.R_bias[r_idx]
    return jnp.sum(_apply_non_linearity(model.non_linearity, core), axis=1)


# ---------------------------------- main -------------------------------------
if __name__ == "__main__":
    key = jax.random.PRNGKey(0)
    k_model, k_r, k_e, k_r2, k_e2 = jax.random.split(key, 5)

    num_ent, num_rel = 12, 5
    emb_dim, window_size = 32, 4      # -> nw = 8, A*D = 192

    model = RealEPallas(
        num_ent, num_rel, emb_dim,
        window_size=window_size,
        non_linearity="tanh",
        ent_non_linearity="relu",
        key=k_model,
    )
    fwd = jax.jit(model.__call__)

    def make_inputs(kr, ke, batch):
        r_idx = jax.random.randint(kr, (batch,), 0, num_rel, dtype=jnp.int32)
        e_keys = jax.random.split(ke, 6)
        e_idx = [jax.random.randint(k, (batch,), 0, num_ent, dtype=jnp.int32)
                 for k in e_keys]
        return r_idx, e_idx

    # 1) small batch: single full-extent block
    r_idx, e_idx = make_inputs(k_r, k_e, 2)
    out = jax.block_until_ready(fwd(r_idx, *e_idx))
    ref = reale_reference(model, r_idx, *e_idx)
    assert out.shape == (2,)
    assert jnp.allclose(out, ref, atol=5e-4, rtol=5e-4), (out, ref)

    # 2) larger batch: multiple tiles with a ragged final block (tiling path)
    r_idx2, e_idx2 = make_inputs(k_r2, k_e2, 20)
    out2 = jax.block_until_ready(fwd(r_idx2, *e_idx2))
    ref2 = reale_reference(model, r_idx2, *e_idx2)
    assert out2.shape == (20,)
    assert jnp.allclose(out2, ref2, atol=5e-4, rtol=5e-4), (out2, ref2)

    print("KERNEL_OK")
</pallas_src>

<mosaic_0001>
module attributes {stable_mosaic.version = 11 : i64} {
  func.func @_reale_kernel(%arg0: i32, %arg1: memref<2x192xbf16, #tpu.memory_space<vmem>>, %arg2: memref<2x192xbf16, #tpu.memory_space<vmem>>, %arg3: memref<2x8xf32, #tpu.memory_space<vmem>>, %arg4: memref<192x8xf32, #tpu.memory_space<vmem>>, %arg5: memref<2x1xf32, #tpu.memory_space<vmem>>) attributes {dimension_semantics = [#tpu.dimension_semantics<parallel>], iteration_bounds = array<i64: 1>, scalar_prefetch = 0 : i64, scratch_operands = 0 : i64, tpu.core_type = #tpu.core_type<tc>, window_params = [{transform_indices = @transform_0, window_bounds = array<i64: 2, 192>}, {transform_indices = @transform_1, window_bounds = array<i64: 2, 192>}, {transform_indices = @transform_2, window_bounds = array<i64: 2, 8>}, {pipeline_mode = #tpu.pipeline_mode<synchronous>, transform_indices = @transform_3, window_bounds = array<i64: 192, 8>}, {transform_indices = @transform_4, window_bounds = array<i64: 2, 1>}]} {
    %c0 = arith.constant 0 : index
    %c0_0 = arith.constant 0 : index
    %0 = vector.load %arg1[%c0, %c0_0] : memref<2x192xbf16, #tpu.memory_space<vmem>>, vector<2x192xbf16>
    %1 = arith.extf %0 : vector<2x192xbf16> to vector<2x192xf32>
    %c0_1 = arith.constant 0 : index
    %c0_2 = arith.constant 0 : index
    %2 = vector.load %arg2[%c0_1, %c0_2] : memref<2x192xbf16, #tpu.memory_space<vmem>>, vector<2x192xbf16>
    %3 = arith.extf %2 : vector<2x192xbf16> to vector<2x192xf32>
    %cst = arith.constant 0.000000e+00 : f32
    %4 = vector.broadcast %cst : f32 to vector<2x192xf32>
    %5 = arith.maximumf %3, %4 : vector<2x192xf32>
    %6 = arith.mulf %1, %5 : vector<2x192xf32>
    %c0_3 = arith.constant 0 : index
    %c0_4 = arith.constant 0 : index
    %7 = vector.load %arg4[%c0_3, %c0_4] : memref<192x8xf32, #tpu.memory_space<vmem>>, vector<192x8xf32>
    %cst_5 = arith.constant dense<0.000000e+00> : vector<2x8xf32>
    %8 = tpu.matmul %6, %7, %cst_5 {dimension_numbers = #tpu.dot_dimension_numbers<[1], [0], [0], [1], [0, 0, 1, 1], [], []>} : vector<2x192xf32>, vector<192x8xf32>, vector<2x8xf32> -> vector<2x8xf32>
    %c0_6 = arith.constant 0 : index
    %c0_7 = arith.constant 0 : index
    %9 = vector.load %arg3[%c0_6, %c0_7] : memref<2x8xf32, #tpu.memory_space<vmem>>, vector<2x8xf32>
    %10 = arith.addf %8, %9 : vector<2x8xf32>
    %11 = math.tanh %10 : vector<2x8xf32>
    %cst_8 = arith.constant dense<0.000000e+00> : vector<2xf32>
    %12 = vector.multi_reduction <add>, %11, %cst_8 [1] : vector<2x8xf32> to vector<2xf32>
    %13 = vector.shape_cast %12 : vector<2xf32> to vector<2x1xf32>
    %c0_9 = arith.constant 0 : index
    %c0_10 = arith.constant 0 : index
    %14 = vector.load %arg5[%c0_9, %c0_10] : memref<2x1xf32, #tpu.memory_space<vmem>>, vector<2x1xf32>
    tpu.vector_store %arg5[%c0_9, %c0_10], %13 {strides = array<i32>} : memref<2x1xf32, #tpu.memory_space<vmem>>, vector<2x1xf32>,
    return
  }
  func.func @transform_0(%arg0: i32) -> (i32, i32) {
    %c0_i32 = arith.constant 0 : i32
    %c0_i32_0 = arith.constant 0 : i32
    return %arg0, %c0_i32 : i32, i32
  }
  func.func @transform_1(%arg0: i32) -> (i32, i32) {
    %c0_i32 = arith.constant 0 : i32
    %c0_i32_0 = arith.constant 0 : i32
    return %arg0, %c0_i32 : i32, i32
  }
  func.func @transform_2(%arg0: i32) -> (i32, i32) {
    %c0_i32 = arith.constant 0 : i32
    %c0_i32_0 = arith.constant 0 : i32
    return %arg0, %c0_i32 : i32, i32
  }
  func.func @transform_3(%arg0: i32) -> (i32, i32) {
    %c0_i32 = arith.constant 0 : i32
    %c0_i32_0 = arith.constant 0 : i32
    %c0_i32_1 = arith.constant 0 : i32
    return %c0_i32, %c0_i32_0 : i32, i32
  }
  func.func @transform_4(%arg0: i32) -> (i32, i32) {
    %c0_i32 = arith.constant 0 : i32
    %c0_i32_0 = arith.constant 0 : i32
    return %arg0, %c0_i32 : i32, i32
  }
}

</mosaic_0001>

<llo_original>
// kernel: a_call__.1
$region0: #{a_call__.1}
  #allocation0 [shape = 'u32[]', space=smem, size = 0x4, offset = 0x4, fixed_abs, tag = 'smem constant byte address 0x4 - core index']
  #allocation1 [shape = 'u32[144,128]{1,0:T(1,128)}', space=vmem, size = 0x12000, scoped, tag = 'internal scratch']
  %s0 = inlined_call_operand.vmem [shape: bf16[2,192], index: 0, kind: input, shape index: {}]
  %s1 = inlined_call_operand.vmem [shape: bf16[2,192], index: 1, kind: input, shape index: {}]
  %s2 = inlined_call_operand.vmem [shape: f32[2,8], index: 2, kind: input, shape index: {}]
  %s3 = inlined_call_operand.vmem [shape: f32[192,8], index: 3, kind: input, shape index: {}]
  %s4 = inlined_call_operand.vmem [shape: f32[2,1], index: 4, kind: output, shape index: {}]
  %s5 = sld [smem:[#allocation0]]
  $region26: #{a_call__.1} parent=0
    _
  %s7 = ssub.s32 1, %s5
  %s8 = scalar_select 0, %s7, %s5
  // Predicated region
  $region2: #{a_call__.1} parent=0 // pred_check
    _
  $region3: #{a_call__.1} parent=0 // pred_check_branch
    %10 = sbr.rel (0) target = $region5
  $region4: #{a_call__.1} parent=0 // pred_region
    _
  $region5: #{a_call__.1} parent=0 // pred_fallthru
    _
  // Predicated region
  $region6: #{a_call__.1} parent=0 // pred_check
    _
  $region7: #{a_call__.1} parent=0 // pred_check_branch
    %12 = sbr.rel (0) target = $region9
  $region8: #{a_call__.1} parent=0 // pred_region
    _
  $region9: #{a_call__.1} parent=0 // pred_fallthru
    _
  // Predicated region
  $region10: #{a_call__.1} parent=0 // pred_check
    _
  $region11: #{a_call__.1} parent=0 // pred_check_branch
    %14 = sbr.rel (0) target = $region13
  $region12: #{a_call__.1} parent=0 // pred_region
    _
  $region13: #{a_call__.1} parent=0 // pred_fallthru
    _
  // Predicated region
  $region14: #{a_call__.1} parent=0 // pred_check
    _
  $region15: #{a_call__.1} parent=0 // pred_check_branch
    %16 = sbr.rel (0) target = $region17
  $region16: #{a_call__.1} parent=0 // pred_region
    _
  $region17: #{a_call__.1} parent=0 // pred_fallthru
    _
  %v17 = vld [vmem:[%s0] sm:$0x3]
  %v18 = vunpack.c.l.bf16 %v17
  %v19 = vld [vmem:[%s1] sm:$0x3]
  %v20 = vunpack.c.l.bf16 %v19
  %v21 = vmax.f32 %v20, 0.0
  %v22 = vmul.f32 %v18, %v21
  %v23 = vld [vmem:[%s3] sm:$0xff]
  %v24 = vld [vmem:[%s3 + $0x8] sm:$0xff]
  %v25 = vld [vmem:[%s3 + $0x10] sm:$0xff]
  %v26 = vld [vmem:[%s3 + $0x18] sm:$0xff]
  %v27 = vld [vmem:[%s3 + $0x20] sm:$0xff]
  %v28 = vld [vmem:[%s3 + $0x28] sm:$0xff]
  %v29 = vld [vmem:[%s3 + $0x30] sm:$0xff]
  %v30 = vld [vmem:[%s3 + $0x38] sm:$0xff]
  %v31 = vld [vmem:[%s3 + $0x40] sm:$0xff]
  %v32 = vld [vmem:[%s3 + $0x48] sm:$0xff]
  %v33 = vld [vmem:[%s3 + $0x50] sm:$0xff]
  %v34 = vld [vmem:[%s3 + $0x58] sm:$0xff]
  %v35 = vld [vmem:[%s3 + $0x60] sm:$0xff]
  %v36 = vld [vmem:[%s3 + $0x68] sm:$0xff]
  %v37 = vld [vmem:[%s3 + $0x70] sm:$0xff]
  %v38 = vld [vmem:[%s3 + $0x78] sm:$0xff]
  %v39 = vld [vmem:[%s3 + $0x80] sm:$0xff]
  %v40 = vld [vmem:[%s3 + $0x88] sm:$0xff]
  %v41 = vld [vmem:[%s3 + $0x90] sm:$0xff]
  %v42 = vld [vmem:[%s3 + $0x98] sm:$0xff]
  %v43 = vld [vmem:[%s3 + $0xa0] sm:$0xff]
  %v44 = vld [vmem:[%s3 + $0xa8] sm:$0xff]
  %v45 = vld [vmem:[%s3 + $0xb0] sm:$0xff]
  %v46 = vld [vmem:[%s3 + $0xb8] sm:$0xff]
  %v47 = vld [vmem:[%s2] sm:$0x3]
  %v50 = vunpack.c.l.s4 1983009808
  %v51 = vunpack.c.0.s8 %v50
  %v52 = vlaneseq
  %v53 = vshrl.u32 %v52, 7
  %v54 = vsub.s32 %v51, %v53
  %v55 = vrot.slane %v22, %v54
  %v56 = vcombine.high %v55, %v55
  %vm58 = vcmask 523264
  %v59 = vsel %vm58, %v56, 0
  %61 = vmatprep.subr.mxu0 0.0
  %62 = vmatpush1.msra.mxu0 %v23
  %63 = vmatprep.subr.mxu0 0.0
  %64 = vmatpush1.msra.mxu0 %v24
  %65 = vmatprep.subr.mxu0 0.0
  %66 = vmatpush1.msra.mxu0 %v25
  %67 = vmatprep.subr.mxu0 0.0
  %68 = vmatpush1.msra.mxu0 %v26
  %69 = vmatprep.subr.mxu0 0.0
  %70 = vmatpush1.msra.mxu0 %v27
  %71 = vmatprep.subr.mxu0 0.0
  %72 = vmatpush1.msra.mxu0 %v28
  %73 = vmatprep.subr.mxu0 0.0
  %74 = vmatpush1.msra.mxu0 %v29
  %75 = vmatprep.subr.mxu0 0.0
  %76 = vmatpush1.msra.mxu0 %v30
  %77 = vmatprep.subr.mxu0 0.0
  %78 = vmatpush1.msra.mxu0 %v31
  %79 = vmatprep.subr.mxu0 0.0
  %80 = vmatpush1.msra.mxu0 %v32
  %81 = vmatprep.subr.mxu0 0.0
  %82 = vmatpush1.msra.mxu0 %v33
  %83 = vmatprep.subr.mxu0 0.0
  %84 = vmatpush1.msra.mxu0 %v34
  %85 = vmatprep.subr.mxu0 0.0
  %86 = vmatpush1.msra.mxu0 %v35
  %87 = vmatprep.subr.mxu0 0.0
  %88 = vmatpush1.msra.mxu0 %v36
  %89 = vmatprep.subr.mxu0 0.0
  %90 = vmatpush1.msra.mxu0 %v37
  %91 = vmatprep.subr.mxu0 0.0
  %92 = vmatpush1.msra.mxu0 %v38
  %93 = vmatprep.subr.mxu0 0.0
  %94 = vmatpush1.msra.mxu0 %v39
  %95 = vmatprep.subr.mxu0 0.0
  %96 = vmatpush1.msra.mxu0 %v40
  %97 = vmatprep.subr.mxu0 0.0
  %98 = vmatpush1.msra.mxu0 %v41
  %99 = vmatprep.subr.mxu0 0.0
  %100 = vmatpush1.msra.mxu0 %v42
  %101 = vmatprep.subr.mxu0 0.0
  %102 = vmatpush1.msra.mxu0 %v43
  %103 = vmatprep.subr.mxu0 0.0
  %104 = vmatpush1.msra.mxu0 %v44
  %105 = vmatprep.subr.mxu0 0.0
  %106 = vmatpush1.msra.mxu0 %v45
  %107 = vmatprep.subr.mxu0 0.0
  %108 = vmatpush1.msra.mxu0 %v46
  %109 = vmatprep.subr.mxu0 0.0
  %110 = vmatpush1.msra.mxu0 0.0
  %111 = vmatprep.subr.mxu0 0.0
  %112 = vmatpush1.msra.mxu0 0.0
  %113 = vmatprep.subr.mxu0 0.0
  %114 = vmatpush1.msra.mxu0 0.0
  %115 = vmatprep.subr.mxu0 0.0
  %116 = vmatpush1.msra.mxu0 0.0
  %117 = vmatprep.subr.mxu0 0.0
  %118 = vmatpush1.msra.mxu0 0.0
  %119 = vmatprep.subr.mxu0 0.0
  %120 = vmatpush1.msra.mxu0 0.0
  %121 = vmatprep.subr.mxu0 0.0
  %122 = vmatpush1.msra.mxu0 0.0
  %123 = vmatprep.subr.mxu0 0.0
  %124 = vmatpush1.msra.mxu0 0.0
  %125 = vmatprep.mubr.f32.mxu0 %v59
  %126 = vmatmul.mubr.f32.gmra.mrb[0].mxu0 %v55
  %v127 = vpop.f32.mrb[0].mxu0
  %v128 = vadd.f32 %v47, %v127
  %v129 = vpop.f32.mrb[0].mxu0
  %130 = vdwg.mxu0
  %v131 = vtanh.pop %v128
  %vm132 = vcmask 58368
  %v133 = vsel %vm132, %v131, 0.0
  %134 = vadd.xlane.f32.xlu0 %v133
  %v135 = vpop.xlane.xlu0 %134
  %vm136 = vcmask 1024
  %137 = vst.msk [vmem:[%s4] sm:$0x3] %vm136, %v135
  // Predicated region
  $region18: #{a_call__.1} parent=0 // pred_check
    _
  $region19: #{a_call__.1} parent=0 // pred_check_branch
    %139 = sbr.rel (0) target = $region21
  $region20: #{a_call__.1} parent=0 // pred_region
    _
  $region21: #{a_call__.1} parent=0 // pred_fallthru
    _
  // Predicated region
  $region22: #{a_call__.1} parent=0 // pred_check
    _
  $region23: #{a_call__.1} parent=0 // pred_check_branch
    %141 = sbr.rel (0) target = $region25
  $region24: #{a_call__.1} parent=0 // pred_region
    _
  $region25: #{a_call__.1} parent=0 // pred_fallthru
    _

</llo_original>
